<compile_context>
chip_gen: v7x
topology: tpu7x:2x2x1
jax: 0.10.0
libtpu: 0.0.40
codegen_flags: <defaults>
</compile_context>

<pallas_src>
import functools

import jax
import jax.numpy as jnp
from jax import lax
from jax.experimental import pallas as pl
from jax.experimental.pallas import tpu as pltpu


def _double_conv_kernel(x_ref, w1_ref, b1_ref, w2_ref, b2_ref, mask_ref, o_ref,
                        *, wp):
    # x_ref:    (1, Cin, F)     flat zero-padded chunk, F = L + 2*(Wp+1)
    # w1_ref:   (Cmid, 9*Cin)   conv1 weights * BN1 scale, K index = (kh*3+kw)*Cin + c
    # b1_ref:   (Cmid, 1)       folded BN1 bias
    # w2_ref:   (Cout, 9*Cmid)  conv2 weights * BN2 scale
    # b2_ref:   (Cout, 1)       folded BN2 bias
    # mask_ref: (1, L)          1.0 on interior pixels of each image, 0.0 on pad/tail
    # o_ref:    (1, Cout, L)    lane-dense wide output; wrapper crops pad cols/rows
    cmid = w1_ref.shape[0]
    L = o_ref.shape[-1]
    halo = wp + 1
    taps = [kh * wp + kw for kh in range(3) for kw in range(3)]

    x = x_ref[0]                                                      # (Cin, F)

    # ---- conv1: one packed-tap matmul (K = 9*Cin, lanes = L) ----
    p1 = jnp.concatenate([x[:, s:s + L] for s in taps], axis=0)       # (9*Cin, L)
    y1 = jnp.dot(w1_ref[...], p1.astype(w1_ref.dtype),
                 preferred_element_type=jnp.float32)                  # (Cmid, L)
    # BN1 bias + ReLU on the f32 VPU; mask re-creates conv2's zero padding
    # (pad rows/cols between images and the rounded-up lane tail).
    mid = (jnp.maximum(y1 + b1_ref[...], 0.0) * mask_ref[...]
           ).astype(w2_ref.dtype)                                     # (Cmid, L)

    # Re-flatten `mid` into padded coordinates without a VMEM scratch round trip.
    zhalo = jnp.zeros((cmid, halo), w2_ref.dtype)
    mid_flat = jnp.concatenate([zhalo, mid, zhalo], axis=1)           # (Cmid, F)

    # ---- conv2: one packed-tap matmul (K = 9*Cmid, lanes = L) ----
    p2 = jnp.concatenate([mid_flat[:, s:s + L] for s in taps], axis=0)  # (9*Cmid, L)
    y2 = jnp.dot(w2_ref[...], p2, preferred_element_type=jnp.float32)   # (Cout, L)
    o_ref[0] = jnp.maximum(y2 + b2_ref[...], 0.0).astype(o_ref.dtype)


def double_conv(x_nchw, w1_packed, b1, w2_packed, b2, *, use_bf16=False,
                images_per_step=None):
    """x_nchw: (N, Cin, H, W); w*_packed: (Cout, 9*Cin) with BN scale folded in;
    b*: (C,) folded BN bias. Returns (N, Cout, H, W)."""
    N, Cin, H, W = x_nchw.shape
    Cmid = w1_packed.shape[0]
    Cout = w2_packed.shape[0]
    assert w1_packed.shape == (Cmid, 9 * Cin)
    assert w2_packed.shape == (Cout, 9 * Cmid)
    Hp, Wp = H + 2, W + 2
    P = Hp * Wp                                # per-image padded flat length

    # How many images to pack along lanes per grid step (keeps VMEM bounded).
    if images_per_step is None:
        images_per_step = max(1, min(N, 4096 // P))
    NB = images_per_step
    G = -(-N // NB)                            # number of grid steps (chunks)
    Npad = G * NB

    L_valid = NB * P                           # lanes carrying real data
    L = -(-L_valid // 128) * 128               # lane-dense: round up to 128
    F = L + 2 * (Wp + 1)                       # flat padded length (+halos for taps)

    # HBM-side layout plumbing: SAME zero-pad each image, concat chunk images
    # along the flat axis, zero-fill the lane tail.
    x_pad = jnp.pad(x_nchw, ((0, Npad - N), (0, 0), (1, 1), (1, 1)))
    x_flat = (x_pad.reshape(G, NB, Cin, P)
              .transpose(0, 2, 1, 3)
              .reshape(G, Cin, L_valid))
    x_flat = jnp.pad(x_flat, ((0, 0), (0, 0), (0, F - L_valid)))

    # Interior mask for the mid activation (same for every chunk): 1 on real
    # image pixels, 0 on each image's pad ring and on the rounded-up tail.
    q = jnp.arange(L, dtype=jnp.int32)
    p = q + (Wp + 1)                           # padded flat coordinate of center
    rr = (p % P) // Wp
    cc = p % Wp
    interior = (rr >= 1) & (rr <= H) & (cc >= 1) & (cc <= W) & (p < L_valid)
    mask = interior.astype(jnp.float32).reshape(1, L)

    cdt = jnp.bfloat16 if use_bf16 else x_nchw.dtype
    x_in = x_flat.astype(cdt)
    w1_in = w1_packed.astype(cdt)
    w2_in = w2_packed.astype(cdt)
    b1c = b1.reshape(Cmid, 1).astype(jnp.float32)
    b2c = b2.reshape(Cout, 1).astype(jnp.float32)

    kernel = functools.partial(_double_conv_kernel, wp=Wp)

    y_wide = pl.pallas_call(
        kernel,
        out_shape=jax.ShapeDtypeStruct((G, Cout, L), x_nchw.dtype),
        grid=(G,),
        in_specs=[
            pl.BlockSpec((1, Cin, F), lambda g: (g, 0, 0)),
            pl.BlockSpec((Cmid, 9 * Cin), lambda g: (0, 0)),
            pl.BlockSpec((Cmid, 1), lambda g: (0, 0)),
            pl.BlockSpec((Cout, 9 * Cmid), lambda g: (0, 0)),
            pl.BlockSpec((Cout, 1), lambda g: (0, 0)),
            pl.BlockSpec((1, L), lambda g: (0, 0)),
        ],
        out_specs=pl.BlockSpec((1, Cout, L), lambda g: (g, 0, 0)),
        compiler_params=pltpu.CompilerParams(
            dimension_semantics=("parallel",)),
    )(x_in, w1_in, b1c, w2_in, b2c, mask)

    # (G, Cout, L) -> drop tail -> (G, Cout, NB, Hp, Wp) -> (Npad, Cout, Hp, Wp)
    # -> crop the pad ring and the padded batch entries.
    y = y_wide[:, :, :L_valid].reshape(G, Cout, NB, Hp, Wp)
    y = y.transpose(0, 2, 1, 3, 4).reshape(Npad, Cout, Hp, Wp)
    return y[:N, :, :H, :W]


def _fold_bn(gamma, beta, mean, var, eps=1e-5):
    scale = gamma / jnp.sqrt(var + eps)
    bias = beta - mean * scale
    return scale, bias


def _pack_conv_weights(w_oihw, scale):
    # (out, in, 3, 3) -> (out, kh, kw, in) -> (out, 9*in), BN scale folded in.
    co, ci, kh, kw = w_oihw.shape
    wp = jnp.transpose(w_oihw, (0, 2, 3, 1)).reshape(co, kh * kw * ci)
    return wp * scale.reshape(co, 1)


def _reference(x_nchw, w1_oihw, s1, b1, w2_oihw, s2, b2):
    dn = ("NCHW", "OIHW", "NCHW")
    y = lax.conv_general_dilated(x_nchw, w1_oihw, (1, 1), "SAME",
                                 dimension_numbers=dn)
    y = jnp.maximum(y * s1.reshape(1, -1, 1, 1) + b1.reshape(1, -1, 1, 1), 0.0)
    z = lax.conv_general_dilated(y, w2_oihw, (1, 1), "SAME",
                                 dimension_numbers=dn)
    z = jnp.maximum(z * s2.reshape(1, -1, 1, 1) + b2.reshape(1, -1, 1, 1), 0.0)
    return z


if __name__ == "__main__":
    # Small shapes consistent with the module: N=2, Cin=4, Cmid=Cout=8, H=W=16
    N, H, W = 2, 16, 16
    Cin, Cmid, Cout = 4, 8, 8

    key = jax.random.PRNGKey(0)
    keys = jax.random.split(key, 10)

    # Input in PyTorch's NCHW layout (kernel works channels-first natively).
    x_nchw = jax.random.normal(keys[0], (N, Cin, H, W), jnp.float32)

    # Conv weights, PyTorch layout (out, in, kh, kw).
    w1_oihw = jax.random.normal(keys[1], (Cmid, Cin, 3, 3), jnp.float32) * 0.1
    w2_oihw = jax.random.normal(keys[2], (Cout, Cmid, 3, 3), jnp.float32) * 0.1

    # BatchNorm params (inference mode: running stats).
    g1 = jax.random.normal(keys[3], (Cmid,), jnp.float32) * 0.1 + 1.0
    be1 = jax.random.normal(keys[4], (Cmid,), jnp.float32) * 0.1
    m1 = jax.random.normal(keys[5], (Cmid,), jnp.float32) * 0.1
    v1 = jax.random.uniform(keys[6], (Cmid,), jnp.float32, 0.5, 1.5)
    g2 = jax.random.normal(keys[7], (Cout,), jnp.float32) * 0.1 + 1.0
    be2 = jax.random.normal(keys[8], (Cout,), jnp.float32) * 0.1
    m2 = jnp.zeros((Cout,), jnp.float32)
    v2 = jax.random.uniform(keys[9], (Cout,), jnp.float32, 0.5, 1.5)

    s1, b1 = _fold_bn(g1, be1, m1, v1)
    s2, b2 = _fold_bn(g2, be2, m2, v2)

    w1p = _pack_conv_weights(w1_oihw, s1)
    w2p = _pack_conv_weights(w2_oihw, s2)

    ref = _reference(x_nchw, w1_oihw, s1, b1, w2_oihw, s2, b2)

    # f32 path (all chips).
    out = double_conv(x_nchw, w1p, b1, w2p, b2)
    out = jax.block_until_ready(out)
    assert out.shape == (N, Cout, H, W)
    assert jnp.allclose(out, ref, atol=1e-4, rtol=1e-4), (
        float(jnp.max(jnp.abs(out - ref))))

    # bf16-MXU path: bf16 activations/weights, f32 accumulate, f32 VPU math.
    out_bf16 = double_conv(x_nchw, w1p, b1, w2p, b2, use_bf16=True)
    out_bf16 = jax.block_until_ready(out_bf16)
    assert jnp.allclose(out_bf16, ref, atol=1e-1, rtol=1e-1), (
        float(jnp.max(jnp.abs(out_bf16 - ref))))

    print("KERNEL_OK")
</pallas_src>

<mosaic_0001>
module attributes {stable_mosaic.version = 11 : i64} {
  func.func @_double_conv_kernel(%arg0: i32, %arg1: memref<1x4x806xf32, #tpu.memory_space<vmem>>, %arg2: memref<8x36xf32, #tpu.memory_space<vmem>>, %arg3: memref<8x1xf32, #tpu.memory_space<vmem>>, %arg4: memref<8x72xf32, #tpu.memory_space<vmem>>, %arg5: memref<8x1xf32, #tpu.memory_space<vmem>>, %arg6: memref<1x768xf32, #tpu.memory_space<vmem>>, %arg7: memref<1x8x768xf32, #tpu.memory_space<vmem>>) attributes {dimension_semantics = [#tpu.dimension_semantics<parallel>], iteration_bounds = array<i64: 1>, scalar_prefetch = 0 : i64, scratch_operands = 0 : i64, tpu.core_type = #tpu.core_type<tc>, window_params = [{transform_indices = @transform_0, window_bounds = array<i64: 1, 4, 806>}, {pipeline_mode = #tpu.pipeline_mode<synchronous>, transform_indices = @transform_1, window_bounds = array<i64: 8, 36>}, {pipeline_mode = #tpu.pipeline_mode<synchronous>, transform_indices = @transform_2, window_bounds = array<i64: 8, 1>}, {pipeline_mode = #tpu.pipeline_mode<synchronous>, transform_indices = @transform_3, window_bounds = array<i64: 8, 72>}, {pipeline_mode = #tpu.pipeline_mode<synchronous>, transform_indices = @transform_4, window_bounds = array<i64: 8, 1>}, {pipeline_mode = #tpu.pipeline_mode<synchronous>, transform_indices = @transform_5, window_bounds = array<i64: 1, 768>}, {transform_indices = @transform_6, window_bounds = array<i64: 1, 8, 768>}]} {
    %c0 = arith.constant 0 : index
    %c0_0 = arith.constant 0 : index
    %c0_1 = arith.constant 0 : index
    %0 = vector.load %arg1[%c0, %c0_0, %c0_1] : memref<1x4x806xf32, #tpu.memory_space<vmem>>, vector<1x4x806xf32>
    %1 = vector.shape_cast %0 : vector<1x4x806xf32> to vector<4x806xf32>
    %2 = vector.extract_strided_slice %1 {offsets = [0, 0], sizes = [4, 768], strides = [1, 1]} : vector<4x806xf32> to vector<4x768xf32>
    %3 = vector.extract_strided_slice %1 {offsets = [0, 1], sizes = [4, 768], strides = [1, 1]} : vector<4x806xf32> to vector<4x768xf32>
    %4 = vector.extract_strided_slice %1 {offsets = [0, 2], sizes = [4, 768], strides = [1, 1]} : vector<4x806xf32> to vector<4x768xf32>
    %5 = vector.extract_strided_slice %1 {offsets = [0, 18], sizes = [4, 768], strides = [1, 1]} : vector<4x806xf32> to vector<4x768xf32>
    %6 = vector.extract_strided_slice %1 {offsets = [0, 19], sizes = [4, 768], strides = [1, 1]} : vector<4x806xf32> to vector<4x768xf32>
    %7 = vector.extract_strided_slice %1 {offsets = [0, 20], sizes = [4, 768], strides = [1, 1]} : vector<4x806xf32> to vector<4x768xf32>
    %8 = vector.extract_strided_slice %1 {offsets = [0, 36], sizes = [4, 768], strides = [1, 1]} : vector<4x806xf32> to vector<4x768xf32>
    %9 = vector.extract_strided_slice %1 {offsets = [0, 37], sizes = [4, 768], strides = [1, 1]} : vector<4x806xf32> to vector<4x768xf32>
    %10 = vector.extract_strided_slice %1 {offsets = [0, 38], sizes = [4, 768], strides = [1, 1]} : vector<4x806xf32> to vector<4x768xf32>
    %11 = tpu.concatenate %2, %3, %4, %5, %6, %7, %8, %9, %10 in 0 : vector<4x768xf32>, vector<4x768xf32>, vector<4x768xf32>, vector<4x768xf32>, vector<4x768xf32>, vector<4x768xf32>, vector<4x768xf32>, vector<4x768xf32>, vector<4x768xf32> -> vector<36x768xf32>
    %c0_2 = arith.constant 0 : index
    %c0_3 = arith.constant 0 : index
    %12 = vector.load %arg2[%c0_2, %c0_3] : memref<8x36xf32, #tpu.memory_space<vmem>>, vector<8x36xf32>
    %cst = arith.constant dense<0.000000e+00> : vector<8x768xf32>
    %13 = tpu.matmul %12, %11, %cst {dimension_numbers = #tpu.dot_dimension_numbers<[1], [0], [0], [1], [0, 0, 1, 1], [], []>} : vector<8x36xf32>, vector<36x768xf32>, vector<8x768xf32> -> vector<8x768xf32>
    %c0_4 = arith.constant 0 : index
    %c0_5 = arith.constant 0 : index
    %14 = vector.load %arg3[%c0_4, %c0_5] : memref<8x1xf32, #tpu.memory_space<vmem>>, vector<8x1xf32>
    %15 = vector.broadcast %14 : vector<8x1xf32> to vector<8x768xf32>
    %16 = arith.addf %13, %15 : vector<8x768xf32>
    %cst_6 = arith.constant 0.000000e+00 : f32
    %17 = vector.broadcast %cst_6 : f32 to vector<8x768xf32>
    %18 = arith.maximumf %16, %17 : vector<8x768xf32>
    %c0_7 = arith.constant 0 : index
    %c0_8 = arith.constant 0 : index
    %19 = vector.load %arg6[%c0_7, %c0_8] : memref<1x768xf32, #tpu.memory_space<vmem>>, vector<1x768xf32>
    %20 = vector.broadcast %19 : vector<1x768xf32> to vector<8x768xf32>
    %21 = arith.mulf %18, %20 : vector<8x768xf32>
    %cst_9 = arith.constant 0.000000e+00 : f32
    %22 = vector.broadcast %cst_9 : f32 to vector<8x19xf32>
    %23 = tpu.concatenate %22, %21, %22 in 1 : vector<8x19xf32>, vector<8x768xf32>, vector<8x19xf32> -> vector<8x806xf32>
    %24 = vector.extract_strided_slice %23 {offsets = [0, 0], sizes = [8, 768], strides = [1, 1]} : vector<8x806xf32> to vector<8x768xf32>
    %25 = vector.extract_strided_slice %23 {offsets = [0, 1], sizes = [8, 768], strides = [1, 1]} : vector<8x806xf32> to vector<8x768xf32>
    %26 = vector.extract_strided_slice %23 {offsets = [0, 2], sizes = [8, 768], strides = [1, 1]} : vector<8x806xf32> to vector<8x768xf32>
    %27 = vector.extract_strided_slice %23 {offsets = [0, 18], sizes = [8, 768], strides = [1, 1]} : vector<8x806xf32> to vector<8x768xf32>
    %28 = vector.extract_strided_slice %23 {offsets = [0, 19], sizes = [8, 768], strides = [1, 1]} : vector<8x806xf32> to vector<8x768xf32>
    %29 = vector.extract_strided_slice %23 {offsets = [0, 20], sizes = [8, 768], strides = [1, 1]} : vector<8x806xf32> to vector<8x768xf32>
    %30 = vector.extract_strided_slice %23 {offsets = [0, 36], sizes = [8, 768], strides = [1, 1]} : vector<8x806xf32> to vector<8x768xf32>
    %31 = vector.extract_strided_slice %23 {offsets = [0, 37], sizes = [8, 768], strides = [1, 1]} : vector<8x806xf32> to vector<8x768xf32>
    %32 = vector.extract_strided_slice %23 {offsets = [0, 38], sizes = [8, 768], strides = [1, 1]} : vector<8x806xf32> to vector<8x768xf32>
    %33 = tpu.concatenate %24, %25, %26, %27, %28, %29, %30, %31, %32 in 0 : vector<8x768xf32>, vector<8x768xf32>, vector<8x768xf32>, vector<8x768xf32>, vector<8x768xf32>, vector<8x768xf32>, vector<8x768xf32>, vector<8x768xf32>, vector<8x768xf32> -> vector<72x768xf32>
    %c0_10 = arith.constant 0 : index
    %c0_11 = arith.constant 0 : index
    %34 = vector.load %arg4[%c0_10, %c0_11] : memref<8x72xf32, #tpu.memory_space<vmem>>, vector<8x72xf32>
    %cst_12 = arith.constant dense<0.000000e+00> : vector<8x768xf32>
    %35 = tpu.matmul %34, %33, %cst_12 {dimension_numbers = #tpu.dot_dimension_numbers<[1], [0], [0], [1], [0, 0, 1, 1], [], []>} : vector<8x72xf32>, vector<72x768xf32>, vector<8x768xf32> -> vector<8x768xf32>
    %c0_13 = arith.constant 0 : index
    %c0_14 = arith.constant 0 : index
    %36 = vector.load %arg5[%c0_13, %c0_14] : memref<8x1xf32, #tpu.memory_space<vmem>>, vector<8x1xf32>
    %37 = vector.broadcast %36 : vector<8x1xf32> to vector<8x768xf32>
    %38 = arith.addf %35, %37 : vector<8x768xf32>
    %cst_15 = arith.constant 0.000000e+00 : f32
    %39 = vector.broadcast %cst_15 : f32 to vector<8x768xf32>
    %40 = arith.maximumf %38, %39 : vector<8x768xf32>
    %c0_16 = arith.constant 0 : index
    %c0_17 = arith.constant 0 : index
    %c0_18 = arith.constant 0 : index
    %41 = vector.load %arg7[%c0_16, %c0_17, %c0_18] : memref<1x8x768xf32, #tpu.memory_space<vmem>>, vector<1x8x768xf32>
    %42 = vector.shape_cast %41 : vector<1x8x768xf32> to vector<8x768xf32>
    %43 = vector.shape_cast %40 : vector<8x768xf32> to vector<1x8x768xf32>
    tpu.vector_store %arg7[%c0_16, %c0_17, %c0_18], %43 {strides = array<i32>} : memref<1x8x768xf32, #tpu.memory_space<vmem>>, vector<1x8x768xf32>,
    return
  }
  func.func @transform_0(%arg0: i32) -> (i32, i32, i32) {
    %c0_i32 = arith.constant 0 : i32
    %c0_i32_0 = arith.constant 0 : i32
    %c0_i32_1 = arith.constant 0 : i32
    return %arg0, %c0_i32, %c0_i32_0 : i32, i32, i32
  }
  func.func @transform_1(%arg0: i32) -> (i32, i32) {
    %c0_i32 = arith.constant 0 : i32
    %c0_i32_0 = arith.constant 0 : i32
    %c0_i32_1 = arith.constant 0 : i32
    return %c0_i32, %c0_i32_0 : i32, i32
  }
  func.func @transform_2(%arg0: i32) -> (i32, i32) {
    %c0_i32 = arith.constant 0 : i32
    %c0_i32_0 = arith.constant 0 : i32
    %c0_i32_1 = arith.constant 0 : i32
    return %c0_i32, %c0_i32_0 : i32, i32
  }
  func.func @transform_3(%arg0: i32) -> (i32, i32) {
    %c0_i32 = arith.constant 0 : i32
    %c0_i32_0 = arith.constant 0 : i32
    %c0_i32_1 = arith.constant 0 : i32
    return %c0_i32, %c0_i32_0 : i32, i32
  }
  func.func @transform_4(%arg0: i32) -> (i32, i32) {
    %c0_i32 = arith.constant 0 : i32
    %c0_i32_0 = arith.constant 0 : i32
    %c0_i32_1 = arith.constant 0 : i32
    return %c0_i32, %c0_i32_0 : i32, i32
  }
  func.func @transform_5(%arg0: i32) -> (i32, i32) {
    %c0_i32 = arith.constant 0 : i32
    %c0_i32_0 = arith.constant 0 : i32
    %c0_i32_1 = arith.constant 0 : i32
    return %c0_i32, %c0_i32_0 : i32, i32
  }
  func.func @transform_6(%arg0: i32) -> (i32, i32, i32) {
    %c0_i32 = arith.constant 0 : i32
    %c0_i32_0 = arith.constant 0 : i32
    %c0_i32_1 = arith.constant 0 : i32
    return %arg0, %c0_i32, %c0_i32_0 : i32, i32, i32
  }
}

</mosaic_0001>

<llo_original>
// kernel: tpu_custom_call.1
$region0: #{tpu_custom_call.1}
  #allocation0 [shape = 'u32[]', space=smem, size = 0x4, offset = 0x4, fixed_abs, tag = 'smem constant byte address 0x4 - core index']
  #allocation1 [shape = 'u32[144,128]{1,0:T(1,128)}', space=vmem, size = 0x12000, scoped, tag = 'internal scratch']
  %s0 = inlined_call_operand.hbm [shape: f32[1,4,806], index: 0, kind: input, shape index: {}]
  %s1 = inlined_call_operand.vmem [shape: f32[8,36], index: 1, kind: input, shape index: {}]
  %s2 = inlined_call_operand.vmem [shape: f32[8,1], index: 2, kind: input, shape index: {}]
  %s3 = inlined_call_operand.vmem [shape: f32[8,72], index: 3, kind: input, shape index: {}]
  %s4 = inlined_call_operand.vmem [shape: f32[8,1], index: 4, kind: input, shape index: {}]
  %s5 = inlined_call_operand.vmem [shape: f32[1,768], index: 5, kind: input, shape index: {}]
  %s6 = inlined_call_operand.hbm [shape: f32[1,8,768], index: 6, kind: output, shape index: {}]
  %s7 = sld [smem:[#allocation0]]
  $region38: #{tpu_custom_call.1} parent=0
    _
  %s9 = ssub.s32 1, %s7
  %s10 = scalar_select 0, %s9, %s7
  $region1: #{tpu_custom_call.1} parent=0
    #allocation2 [shape = 'u8[14336]{0}', space=vmem, size = 0x3800, scoped, tag = 'input window, operand 0, single buffered']
    #allocation3 [shape = 's32[1]{0}', space=sflag, size = 0x4, scoped, tag = 'scoped memory for tpu_custom_call.1']
    #allocation4 [shape = 's32[1]{0}', space=sflag, size = 0x4, scoped, tag = 'scoped memory for tpu_custom_call.1']
    #allocation5 [shape = 'u8[24576]{0}', space=vmem, size = 0x6000, scoped, tag = 'output window, operand 0, single buffered']
    %11 = vsyncpa [#allocation3], 0
    %12 = vsyncpa [#allocation4], 0
    // Predicated region
    $region2: #{tpu_custom_call.1} parent=1 // pred_check
      _
    $region3: #{tpu_custom_call.1} parent=1 // pred_check_branch
      %14 = sbr.rel (0) target = $region5
    $region4: #{tpu_custom_call.1} parent=1 // pred_region
      %s16 = ssub.s32 448, 448
      %17 = vsyncadd [#allocation3], %s16
      %s19 = sshll.u32 [#allocation2], 4
      %s20 = int_to_ptr.vmem [resolvable:$true] %s19
      %22 = dma.hbm_to_vmem [thread:$0]  %s0, 448, %s20, [#allocation3]
    $region5: #{tpu_custom_call.1} parent=1 // pred_fallthru
      _
    // Predicated region
    $region6: #{tpu_custom_call.1} parent=1 // pred_check
      _
    $region7: #{tpu_custom_call.1} parent=1 // pred_check_branch
      %24 = sbr.rel (0) target = $region9
    $region8: #{tpu_custom_call.1} parent=1 // pred_region
      _
    $region9: #{tpu_custom_call.1} parent=1 // pred_fallthru
      _
    // Predicated region
    $region10: #{tpu_custom_call.1} parent=1 // pred_check
      _
    $region11: #{tpu_custom_call.1} parent=1 // pred_check_branch
      %26 = sbr.rel (0) target = $region13
    $region12: #{tpu_custom_call.1} parent=1 // pred_region
      _
    $region13: #{tpu_custom_call.1} parent=1 // pred_fallthru
      _
    // Predicated region
    $region14: #{tpu_custom_call.1} parent=1 // pred_check
      _
    $region15: #{tpu_custom_call.1} parent=1 // pred_check_branch
      %28 = sbr.rel (0) target = $region17
    $region16: #{tpu_custom_call.1} parent=1 // pred_region
      _
    $region17: #{tpu_custom_call.1} parent=1 // pred_fallthru
      _
    // Predicated region
    $region18: #{tpu_custom_call.1} parent=1 // pred_check
      _
    $region19: #{tpu_custom_call.1} parent=1 // pred_check_branch
      %30 = sbr.rel (0) target = $region21
    $region20: #{tpu_custom_call.1} parent=1 // pred_region
      _
    $region21: #{tpu_custom_call.1} parent=1 // pred_fallthru
      _
    // Predicated region
    $region22: #{tpu_custom_call.1} parent=1 // pred_check
      _
    $region23: #{tpu_custom_call.1} parent=1 // pred_check_branch
      %32 = sbr.rel (0) target = $region25
    $region24: #{tpu_custom_call.1} parent=1 // pred_region
      _
    $region25: #{tpu_custom_call.1} parent=1 // pred_fallthru
      _
    // Predicated region
    $region26: #{tpu_custom_call.1} parent=1 // pred_check
      _
    $region27: #{tpu_custom_call.1} parent=1 // pred_check_branch
      %34 = sbr.rel (0) target = $region29
    $region28: #{tpu_custom_call.1} parent=1 // pred_region
      %35 = dma.done [#allocation3], 448
    $region29: #{tpu_custom_call.1} parent=1 // pred_fallthru
      _
    %v36 = vld [vmem:[#allocation2] sm:$0xff]
    %v37 = vld [vmem:[#allocation2 + $0x8] sm:$0xff]
    %v38 = vld [vmem:[#allocation2 + $0x10] sm:$0xff]
    %v39 = vld [vmem:[#allocation2 + $0x18] sm:$0xf]
    %v43 = vcombine.high %v36, %v36
    %v44 = vcombine.high %v37, %v37
    %v45 = vcombine.high %v38, %v38
    %v50 = vcombine.low %v36, %v36
    %v51 = vcombine.low %v37, %v37
    %v52 = vcombine.low %v38, %v38
    %v53 = vcombine.low %v39, %v39
    %54 = vrot.lane.b32.xlu0 %v50, 127
    %v55 = vpop.permute.xlu0 %54
    %56 = vrot.lane.b32.xlu0 %v36, 127
    %v57 = vpop.permute.xlu0 %56
    %58 = vrot.lane.b32.xlu0 %v51, 127
    %v59 = vpop.permute.xlu0 %58
    %60 = vrot.lane.b32.xlu0 %v37, 127
    %v61 = vpop.permute.xlu0 %60
    %62 = vrot.lane.b32.xlu0 %v52, 127
    %v63 = vpop.permute.xlu0 %62
    %64 = vrot.lane.b32.xlu0 %v38, 127
    %v65 = vpop.permute.xlu0 %64
    %66 = vrot.lane.b32.xlu0 %v53, 127
    %v67 = vpop.permute.xlu0 %66
    %vm68 = vcmask 1039360
    %v69 = vsel %vm68, %v55, %v57
    %v70 = vsel %vm68, %v57, %v59
    %v71 = vsel %vm68, %v59, %v61
    %v72 = vsel %vm68, %v61, %v63
    %v73 = vsel %vm68, %v63, %v65
    %v74 = vsel %vm68, %v65, %v67
    %81 = vrot.lane.b32.xlu0 %v36, 126
    %v82 = vpop.permute.xlu0 %81
    %83 = vrot.lane.b32.xlu0 %v43, 126
    %v84 = vpop.permute.xlu0 %83
    %85 = vrot.lane.b32.xlu0 %v37, 126
    %v86 = vpop.permute.xlu0 %85
    %87 = vrot.lane.b32.xlu0 %v44, 126
    %v88 = vpop.permute.xlu0 %87
    %89 = vrot.lane.b32.xlu0 %v38, 126
    %v90 = vpop.permute.xlu0 %89
    %91 = vrot.lane.b32.xlu0 %v45, 126
    %v92 = vpop.permute.xlu0 %91
    %93 = vrot.lane.b32.xlu0 %v39, 126
    %v94 = vpop.permute.xlu0 %93
    %vm95 = vcmask 1031168
    %v96 = vsel %vm95, %v82, %v84
    %v97 = vsel %vm95, %v84, %v86
    %v98 = vsel %vm95, %v86, %v88
    %v99 = vsel %vm95, %v88, %v90
    %v100 = vsel %vm95, %v90, %v92
    %v101 = vsel %vm95, %v92, %v94
    %108 = vrot.lane.b32.xlu0 %v50, 110
    %v109 = vpop.permute.xlu0 %108
    %110 = vrot.lane.b32.xlu0 %v36, 110
    %v111 = vpop.permute.xlu0 %110
    %112 = vrot.lane.b32.xlu0 %v51, 110
    %v113 = vpop.permute.xlu0 %112
    %114 = vrot.lane.b32.xlu0 %v37, 110
    %v115 = vpop.permute.xlu0 %114
    %116 = vrot.lane.b32.xlu0 %v52, 110
    %v117 = vpop.permute.xlu0 %116
    %118 = vrot.lane.b32.xlu0 %v38, 110
    %v119 = vpop.permute.xlu0 %118
    %120 = vrot.lane.b32.xlu0 %v53, 110
    %v121 = vpop.permute.xlu0 %120
    %vm122 = vcmask 900096
    %v123 = vsel %vm122, %v109, %v111
    %v124 = vsel %vm122, %v111, %v113
    %v125 = vsel %vm122, %v113, %v115
    %v126 = vsel %vm122, %v115, %v117
    %v127 = vsel %vm122, %v117, %v119
    %v128 = vsel %vm122, %v119, %v121
    %135 = vrot.lane.b32.xlu0 %v36, 109
    %v136 = vpop.permute.xlu0 %135
    %137 = vrot.lane.b32.xlu0 %v43, 109
    %v138 = vpop.permute.xlu0 %137
    %139 = vrot.lane.b32.xlu0 %v37, 109
    %v140 = vpop.permute.xlu0 %139
    %141 = vrot.lane.b32.xlu0 %v44, 109
    %v142 = vpop.permute.xlu0 %141
    %143 = vrot.lane.b32.xlu0 %v38, 109
    %v144 = vpop.permute.xlu0 %143
    %145 = vrot.lane.b32.xlu0 %v45, 109
    %v146 = vpop.permute.xlu0 %145
    %147 = vrot.lane.b32.xlu0 %v39, 109
    %v148 = vpop.permute.xlu0 %147
    %vm149 = vcmask 891904
    %v150 = vsel %vm149, %v136, %v138
    %v151 = vsel %vm149, %v138, %v140
    %v152 = vsel %vm149, %v140, %v142
    %v153 = vsel %vm149, %v142, %v144
    %v154 = vsel %vm149, %v144, %v146
    %v155 = vsel %vm149, %v146, %v148
    %162 = vrot.lane.b32.xlu0 %v50, 108
    %v163 = vpop.permute.xlu0 %162
    %164 = vrot.lane.b32.xlu0 %v36, 108
    %v165 = vpop.permute.xlu0 %164
    %166 = vrot.lane.b32.xlu0 %v51, 108
    %v167 = vpop.permute.xlu0 %166
    %168 = vrot.lane.b32.xlu0 %v37, 108
    %v169 = vpop.permute.xlu0 %168
    %170 = vrot.lane.b32.xlu0 %v52, 108
    %v171 = vpop.permute.xlu0 %170
    %172 = vrot.lane.b32.xlu0 %v38, 108
    %v173 = vpop.permute.xlu0 %172
    %174 = vrot.lane.b32.xlu0 %v53, 108
    %v175 = vpop.permute.xlu0 %174
    %vm176 = vcmask 883712
    %v177 = vsel %vm176, %v163, %v165
    %v178 = vsel %vm176, %v165, %v167
    %v179 = vsel %vm176, %v167, %v169
    %v180 = vsel %vm176, %v169, %v171
    %v181 = vsel %vm176, %v171, %v173
    %v182 = vsel %vm176, %v173, %v175
    %189 = vrot.lane.b32.xlu0 %v36, 92
    %v190 = vpop.permute.xlu0 %189
    %191 = vrot.lane.b32.xlu0 %v43, 92
    %v192 = vpop.permute.xlu0 %191
    %193 = vrot.lane.b32.xlu0 %v37, 92
    %v194 = vpop.permute.xlu0 %193
    %195 = vrot.lane.b32.xlu0 %v44, 92
    %v196 = vpop.permute.xlu0 %195
    %197 = vrot.lane.b32.xlu0 %v38, 92
    %v198 = vpop.permute.xlu0 %197
    %199 = vrot.lane.b32.xlu0 %v45, 92
    %v200 = vpop.permute.xlu0 %199
    %201 = vrot.lane.b32.xlu0 %v39, 92
    %v202 = vpop.permute.xlu0 %201
    %vm203 = vcmask 752640
    %v204 = vsel %vm203, %v190, %v192
    %v205 = vsel %vm203, %v192, %v194
    %v206 = vsel %vm203, %v194, %v196
    %v207 = vsel %vm203, %v196, %v198
    %v208 = vsel %vm203, %v198, %v200
    %v209 = vsel %vm203, %v200, %v202
    %216 = vrot.lane.b32.xlu0 %v50, 91
    %v217 = vpop.permute.xlu0 %216
    %218 = vrot.lane.b32.xlu0 %v36, 91
    %v219 = vpop.permute.xlu0 %218
    %220 = vrot.lane.b32.xlu0 %v51, 91
    %v221 = vpop.permute.xlu0 %220
    %222 = vrot.lane.b32.xlu0 %v37, 91
    %v223 = vpop.permute.xlu0 %222
    %224 = vrot.lane.b32.xlu0 %v52, 91
    %v225 = vpop.permute.xlu0 %224
    %226 = vrot.lane.b32.xlu0 %v38, 91
    %v227 = vpop.permute.xlu0 %226
    %228 = vrot.lane.b32.xlu0 %v53, 91
    %v229 = vpop.permute.xlu0 %228
    %vm230 = vcmask 744448
    %v231 = vsel %vm230, %v217, %v219
    %v232 = vsel %vm230, %v219, %v221
    %v233 = vsel %vm230, %v221, %v223
    %v234 = vsel %vm230, %v223, %v225
    %v235 = vsel %vm230, %v225, %v227
    %v236 = vsel %vm230, %v227, %v229
    %243 = vrot.lane.b32.xlu0 %v36, 90
    %v244 = vpop.permute.xlu0 %243
    %245 = vrot.lane.b32.xlu0 %v43, 90
    %v246 = vpop.permute.xlu0 %245
    %247 = vrot.lane.b32.xlu0 %v37, 90
    %v248 = vpop.permute.xlu0 %247
    %249 = vrot.lane.b32.xlu0 %v44, 90
    %v250 = vpop.permute.xlu0 %249
    %251 = vrot.lane.b32.xlu0 %v38, 90
    %v252 = vpop.permute.xlu0 %251
    %253 = vrot.lane.b32.xlu0 %v45, 90
    %v254 = vpop.permute.xlu0 %253
    %255 = vrot.lane.b32.xlu0 %v39, 90
    %v256 = vpop.permute.xlu0 %255
    %vm257 = vcmask 736256
    %v258 = vsel %vm257, %v244, %v246
    %v259 = vsel %vm257, %v246, %v248
    %v260 = vsel %vm257, %v248, %v250
    %v261 = vsel %vm257, %v250, %v252
    %v262 = vsel %vm257, %v252, %v254
    %v263 = vsel %vm257, %v254, %v256
    %vm264 = vcmask 1043456
    %v265 = vsel %vm264, %v36, %v69
    %v266 = vsel %vm264, %v43, %v70
    %v267 = vsel %vm264, %v37, %v71
    %v268 = vsel %vm264, %v44, %v72
    %v269 = vsel %vm264, %v38, %v73
    %v270 = vsel %vm264, %v45, %v74
    %v271 = vsel %vm264, %v96, %v123
    %v272 = vsel %vm264, %v97, %v124
    %v273 = vsel %vm264, %v98, %v125
    %v274 = vsel %vm264, %v99, %v126
    %v275 = vsel %vm264, %v100, %v127
    %v276 = vsel %vm264, %v101, %v128
    %v277 = vsel %vm264, %v150, %v177
    %v278 = vsel %vm264, %v151, %v178
    %v279 = vsel %vm264, %v152, %v179
    %v280 = vsel %vm264, %v153, %v180
    %v281 = vsel %vm264, %v154, %v181
    %v282 = vsel %vm264, %v155, %v182
    %v283 = vsel %vm264, %v204, %v231
    %v284 = vsel %vm264, %v205, %v232
    %v285 = vsel %vm264, %v206, %v233
    %v286 = vsel %vm264, %v207, %v234
    %v287 = vsel %vm264, %v208, %v235
    %v288 = vsel %vm264, %v209, %v236
    %v289 = vld [vmem:[%s1] sm:$0xff]
    %v290 = vld [vmem:[%s2] sm:$0xff]
    %292 = vset.pattern.permute.xlu0 0
    %293 = vperm.xlu0 %292, %v290
    %v294 = vpop.permute.xlu0 %293
    %vm296 = vcmask 293888
    %v298 = vsel %vm296, %v289, 0
    %v300 = vsel %vm264, %v258, 0
    %v302 = vsel %vm264, %v259, 0
    %v304 = vsel %vm264, %v260, 0
    %v306 = vsel %vm264, %v261, 0
    %v308 = vsel %vm264, %v262, 0
    %v310 = vsel %vm264, %v263, 0
    %312 = vmatprep.subr.mxu0 %v266
    %313 = vmatpush1.msra.mxu0 %v265
    %314 = vmatprep.subr.mxu0 %v272
    %315 = vmatpush1.msra.mxu0 %v271
    %316 = vmatprep.subr.mxu0 %v278
    %317 = vmatpush1.msra.mxu0 %v277
    %318 = vmatprep.subr.mxu0 %v284
    %319 = vmatpush1.msra.mxu0 %v283
    %320 = vmatprep.subr.mxu0 %v302
    %321 = vmatpush1.msra.mxu0 %v300
    %322 = vmatprep.subr.mxu0 0.0
    %323 = vmatpush1.msra.mxu0 0.0
    %324 = vmatprep.subr.mxu0 0.0
    %325 = vmatpush1.msra.mxu0 0.0
    %326 = vmatprep.subr.mxu0 0.0
    %327 = vmatpush1.msra.mxu0 0.0
    %328 = vmatprep.subr.mxu0 0.0
    %329 = vmatpush1.msra.mxu0 0.0
    %330 = vmatprep.subr.mxu0 0.0
    %331 = vmatpush1.msra.mxu0 0.0
    %332 = vmatprep.subr.mxu0 0.0
    %333 = vmatpush1.msra.mxu0 0.0
    %334 = vmatprep.subr.mxu0 0.0
    %335 = vmatpush1.msra.mxu0 0.0
    %336 = vmatprep.subr.mxu0 0.0
    %337 = vmatpush1.msra.mxu0 0.0
    %338 = vmatprep.subr.mxu0 0.0
    %339 = vmatpush1.msra.mxu0 0.0
    %340 = vmatprep.subr.mxu0 0.0
    %341 = vmatpush1.msra.mxu0 0.0
    %342 = vmatprep.subr.mxu0 0.0
    %343 = vmatpush1.msra.mxu0 0.0
    %344 = vmatprep.subr.mxu0 0.0
    %345 = vmatpush1.msra.mxu0 0.0
    %346 = vmatprep.subr.mxu0 0.0
    %347 = vmatpush1.msra.mxu0 0.0
    %348 = vmatprep.subr.mxu0 0.0
    %349 = vmatpush1.msra.mxu0 0.0
    %350 = vmatprep.subr.mxu0 0.0
    %351 = vmatpush1.msra.mxu0 0.0
    %352 = vmatprep.subr.mxu0 0.0
    %353 = vmatpush1.msra.mxu0 0.0
    %354 = vmatprep.subr.mxu0 0.0
    %355 = vmatpush1.msra.mxu0 0.0
    %356 = vmatprep.subr.mxu0 0.0
    %357 = vmatpush1.msra.mxu0 0.0
    %358 = vmatprep.subr.mxu0 0.0
    %359 = vmatpush1.msra.mxu0 0.0
    %360 = vmatprep.subr.mxu0 0.0
    %361 = vmatpush1.msra.mxu0 0.0
    %362 = vmatprep.subr.mxu0 0.0
    %363 = vmatpush1.msra.mxu0 0.0
    %364 = vmatprep.subr.mxu0 0.0
    %365 = vmatpush1.msra.mxu0 0.0
    %366 = vmatprep.subr.mxu0 0.0
    %367 = vmatpush1.msra.mxu0 0.0
    %368 = vmatprep.subr.mxu0 0.0
    %369 = vmatpush1.msra.mxu0 0.0
    %370 = vmatprep.subr.mxu0 0.0
    %371 = vmatpush1.msra.mxu0 0.0
    %372 = vmatprep.subr.mxu0 0.0
    %373 = vmatpush1.msra.mxu0 0.0
    %374 = vmatprep.subr.mxu0 0.0
    %375 = vmatpush1.msra.mxu0 0.0
    %376 = vmatprep.mubr.f32.mxu0 0.0
    %377 = vmatmul.mubr.f32.gmra.mrb[0].mxu0 %v298
    %v378 = vpop.f32.mrb[0].mxu0
    %v379 = vadd.f32 %v294, %v378
    %v380 = vpop.f32.mrb[0].mxu0
    %v381 = vadd.f32 %v294, %v380
    %382 = vdwg.mxu0
    %383 = vmatprep.subr.mxu0 %v268
    %384 = vmatpush1.msra.mxu0 %v267
    %385 = vmatprep.subr.mxu0 %v274
    %386 = vmatpush1.msra.mxu0 %v273
    %387 = vmatprep.subr.mxu0 %v280
    %388 = vmatpush1.msra.mxu0 %v279
    %389 = vmatprep.subr.mxu0 %v286
    %390 = vmatpush1.msra.mxu0 %v285
    %391 = vmatprep.subr.mxu0 %v306
    %392 = vmatpush1.msra.mxu0 %v304
    %393 = vmatprep.subr.mxu0 0.0
    %394 = vmatpush1.msra.mxu0 0.0
    %395 = vmatprep.subr.mxu0 0.0
    %396 = vmatpush1.msra.mxu0 0.0
    %397 = vmatprep.subr.mxu0 0.0
    %398 = vmatpush1.msra.mxu0 0.0
    %399 = vmatprep.subr.mxu0 0.0
    %400 = vmatpush1.msra.mxu0 0.0
    %401 = vmatprep.subr.mxu0 0.0
    %402 = vmatpush1.msra.mxu0 0.0
    %403 = vmatprep.subr.mxu0 0.0
    %404 = vmatpush1.msra.mxu0 0.0
    %405 = vmatprep.subr.mxu0 0.0
    %406 = vmatpush1.msra.mxu0 0.0
    %407 = vmatprep.subr.mxu0 0.0
    %408 = vmatpush1.msra.mxu0 0.0
    %409 = vmatprep.subr.mxu0 0.0
    %410 = vmatpush1.msra.mxu0 0.0
    %411 = vmatprep.subr.mxu0 0.0
    %412 = vmatpush1.msra.mxu0 0.0
    %413 = vmatprep.subr.mxu0 0.0
    %414 = vmatpush1.msra.mxu0 0.0
    %415 = vmatprep.subr.mxu0 0.0
    %416 = vmatpush1.msra.mxu0 0.0
    %417 = vmatprep.subr.mxu0 0.0
    %418 = vmatpush1.msra.mxu0 0.0
    %419 = vmatprep.subr.mxu0 0.0
    %420 = vmatpush1.msra.mxu0 0.0
    %421 = vmatprep.subr.mxu0 0.0
    %422 = vmatpush1.msra.mxu0 0.0
    %423 = vmatprep.subr.mxu0 0.0
    %424 = vmatpush1.msra.mxu0 0.0
    %425 = vmatprep.subr.mxu0 0.0
    %426 = vmatpush1.msra.mxu0 0.0
    %427 = vmatprep.subr.mxu0 0.0
    %428 = vmatpush1.msra.mxu0 0.0
    %429 = vmatprep.subr.mxu0 0.0
    %430 = vmatpush1.msra.mxu0 0.0
    %431 = vmatprep.subr.mxu0 0.0
    %432 = vmatpush1.msra.mxu0 0.0
    %433 = vmatprep.subr.mxu0 0.0
    %434 = vmatpush1.msra.mxu0 0.0
    %435 = vmatprep.subr.mxu0 0.0
    %436 = vmatpush1.msra.mxu0 0.0
    %437 = vmatprep.subr.mxu0 0.0
    %438 = vmatpush1.msra.mxu0 0.0
    %439 = vmatprep.subr.mxu0 0.0
    %440 = vmatpush1.msra.mxu0 0.0
    %441 = vmatprep.subr.mxu0 0.0
    %442 = vmatpush1.msra.mxu0 0.0
    %443 = vmatprep.subr.mxu0 0.0
    %444 = vmatpush1.msra.mxu0 0.0
    %445 = vmatprep.subr.mxu0 0.0
    %446 = vmatpush1.msra.mxu0 0.0
    %447 = vmatprep.mubr.f32.mxu0 0.0
    %448 = vmatmul.mubr.f32.gmra.mrb[0].mxu0 %v298
    %v449 = vpop.f32.mrb[0].mxu0
    %v450 = vadd.f32 %v294, %v449
    %v451 = vpop.f32.mrb[0].mxu0
    %v452 = vadd.f32 %v294, %v451
    %453 = vdwg.mxu0
    %454 = vmatprep.subr.mxu0 %v270
    %455 = vmatpush1.msra.mxu0 %v269
    %456 = vmatprep.subr.mxu0 %v276
    %457 = vmatpush1.msra.mxu0 %v275
    %458 = vmatprep.subr.mxu0 %v282
    %459 = vmatpush1.msra.mxu0 %v281
    %460 = vmatprep.subr.mxu0 %v288
    %461 = vmatpush1.msra.mxu0 %v287
    %462 = vmatprep.subr.mxu0 %v310
    %463 = vmatpush1.msra.mxu0 %v308
    %464 = vmatprep.subr.mxu0 0.0
    %465 = vmatpush1.msra.mxu0 0.0
    %466 = vmatprep.subr.mxu0 0.0
    %467 = vmatpush1.msra.mxu0 0.0
    %468 = vmatprep.subr.mxu0 0.0
    %469 = vmatpush1.msra.mxu0 0.0
    %470 = vmatprep.subr.mxu0 0.0
    %471 = vmatpush1.msra.mxu0 0.0
    %472 = vmatprep.subr.mxu0 0.0
    %473 = vmatpush1.msra.mxu0 0.0
    %474 = vmatprep.subr.mxu0 0.0
    %475 = vmatpush1.msra.mxu0 0.0
    %476 = vmatprep.subr.mxu0 0.0
    %477 = vmatpush1.msra.mxu0 0.0
    %478 = vmatprep.subr.mxu0 0.0
    %479 = vmatpush1.msra.mxu0 0.0
    %480 = vmatprep.subr.mxu0 0.0
    %481 = vmatpush1.msra.mxu0 0.0
    %482 = vmatprep.subr.mxu0 0.0
    %483 = vmatpush1.msra.mxu0 0.0
    %484 = vmatprep.subr.mxu0 0.0
    %485 = vmatpush1.msra.mxu0 0.0
    %486 = vmatprep.subr.mxu0 0.0
    %487 = vmatpush1.msra.mxu0 0.0
    %488 = vmatprep.subr.mxu0 0.0
    %489 = vmatpush1.msra.mxu0 0.0
    %490 = vmatprep.subr.mxu0 0.0
    %491 = vmatpush1.msra.mxu0 0.0
    %492 = vmatprep.subr.mxu0 0.0
    %493 = vmatpush1.msra.mxu0 0.0
    %494 = vmatprep.subr.mxu0 0.0
    %495 = vmatpush1.msra.mxu0 0.0
    %496 = vmatprep.subr.mxu0 0.0
    %497 = vmatpush1.msra.mxu0 0.0
    %498 = vmatprep.subr.mxu0 0.0
    %499 = vmatpush1.msra.mxu0 0.0
    %500 = vmatprep.subr.mxu0 0.0
    %501 = vmatpush1.msra.mxu0 0.0
    %502 = vmatprep.subr.mxu0 0.0
    %503 = vmatpush1.msra.mxu0 0.0
    %504 = vmatprep.subr.mxu0 0.0
    %505 = vmatpush1.msra.mxu0 0.0
    %506 = vmatprep.subr.mxu0 0.0
    %507 = vmatpush1.msra.mxu0 0.0
    %508 = vmatprep.subr.mxu0 0.0
    %509 = vmatpush1.msra.mxu0 0.0
    %510 = vmatprep.subr.mxu0 0.0
    %511 = vmatpush1.msra.mxu0 0.0
    %512 = vmatprep.subr.mxu0 0.0
    %513 = vmatpush1.msra.mxu0 0.0
    %514 = vmatprep.subr.mxu0 0.0
    %515 = vmatpush1.msra.mxu0 0.0
    %516 = vmatprep.subr.mxu0 0.0
    %517 = vmatpush1.msra.mxu0 0.0
    %518 = vmatprep.mubr.f32.mxu0 0.0
    %519 = vmatmul.mubr.f32.gmra.mrb[0].mxu0 %v298
    %v520 = vpop.f32.mrb[0].mxu0
    %v521 = vadd.f32 %v294, %v520
    %v522 = vpop.f32.mrb[0].mxu0
    %v523 = vadd.f32 %v294, %v522
    %524 = vdwg.mxu0
    %v525 = vmax.f32 %v379, 0.0
    %v526 = vmax.f32 %v381, 0.0
    %v527 = vmax.f32 %v450, 0.0
    %v528 = vmax.f32 %v452, 0.0
    %v529 = vmax.f32 %v521, 0.0
    %v530 = vmax.f32 %v523, 0.0
    %v531 = vld [vmem:[%s5] sm:$0x3f]
    %v533 = vlaneseq
    %v534 = vshrl.u32 %v533, 7
    %v535 = vsub.s32 0, %v534
    %v536 = vrot.slane %v531, %v535
    %v537 = vlaneseq
    %v538 = vshrl.u32 %v537, 7
    %v539 = vsub.s32 1, %v538
    %v540 = vrot.slane %v531, %v539
    %v541 = vlaneseq
    %v542 = vshrl.u32 %v541, 7
    %v543 = vsub.s32 2, %v542
    %v544 = vrot.slane %v531, %v543
    %v545 = vlaneseq
    %v546 = vshrl.u32 %v545, 7
    %v547 = vsub.s32 3, %v546
    %v548 = vrot.slane %v531, %v547
    %v549 = vlaneseq
    %v550 = vshrl.u32 %v549, 7
    %v551 = vsub.s32 4, %v550
    %v552 = vrot.slane %v531, %v551
    %v553 = vlaneseq
    %v554 = vshrl.u32 %v553, 7
    %v555 = vsub.s32 5, %v554
    %v556 = vrot.slane %v531, %v555
    %v563 = vmul.f32 %v525, %v536
    %v564 = vmul.f32 %v526, %v540
    %v565 = vmul.f32 %v527, %v544
    %v566 = vmul.f32 %v528, %v548
    %v567 = vmul.f32 %v529, %v552
    %v568 = vmul.f32 %v530, %v556
    %575 = vrot.lane.b32.xlu0 %v563, 19
    %v576 = vpop.permute.xlu0 %575
    %577 = vrot.lane.b32.xlu0 %v564, 19
    %v578 = vpop.permute.xlu0 %577
    %579 = vrot.lane.b32.xlu0 %v565, 19
    %v580 = vpop.permute.xlu0 %579
    %581 = vrot.lane.b32.xlu0 %v566, 19
    %v582 = vpop.permute.xlu0 %581
    %583 = vrot.lane.b32.xlu0 %v567, 19
    %v584 = vpop.permute.xlu0 %583
    %585 = vrot.lane.b32.xlu0 %v568, 19
    %v586 = vpop.permute.xlu0 %585
    %vm587 = vcmask 154624
    %v588 = vsel %vm587, %v576, %v578
    %v589 = vsel %vm587, %v578, %v580
    %v590 = vsel %vm587, %v580, %v582
    %v591 = vsel %vm587, %v582, %v584
    %v592 = vsel %vm587, %v584, %v586
    %v600 = vsel %vm587, 0.0, %v576
    %v601 = vsel %vm587, %v586, 0.0
    %604 = vrot.lane.b32.xlu0 %v600, 127
    %v605 = vpop.permute.xlu0 %604
    %606 = vrot.lane.b32.xlu0 %v588, 127
    %v607 = vpop.permute.xlu0 %606
    %608 = vrot.lane.b32.xlu0 %v589, 127
    %v609 = vpop.permute.xlu0 %608
    %610 = vrot.lane.b32.xlu0 %v590, 127
    %v611 = vpop.permute.xlu0 %610
    %612 = vrot.lane.b32.xlu0 %v591, 127
    %v613 = vpop.permute.xlu0 %612
    %614 = vrot.lane.b32.xlu0 %v592, 127
    %v615 = vpop.permute.xlu0 %614
    %616 = vrot.lane.b32.xlu0 %v601, 127
    %v617 = vpop.permute.xlu0 %616
    %v618 = vsel %vm68, %v605, %v607
    %v619 = vsel %vm68, %v607, %v609
    %v620 = vsel %vm68, %v609, %v611
    %v621 = vsel %vm68, %v611, %v613
    %v622 = vsel %vm68, %v613, %v615
    %v623 = vsel %vm68, %v615, %v617
    %630 = vrot.lane.b32.xlu0 %v600, 126
    %v631 = vpop.permute.xlu0 %630
    %632 = vrot.lane.b32.xlu0 %v588, 126
    %v633 = vpop.permute.xlu0 %632
    %634 = vrot.lane.b32.xlu0 %v589, 126
    %v635 = vpop.permute.xlu0 %634
    %636 = vrot.lane.b32.xlu0 %v590, 126
    %v637 = vpop.permute.xlu0 %636
    %638 = vrot.lane.b32.xlu0 %v591, 126
    %v639 = vpop.permute.xlu0 %638
    %640 = vrot.lane.b32.xlu0 %v592, 126
    %v641 = vpop.permute.xlu0 %640
    %642 = vrot.lane.b32.xlu0 %v601, 126
    %v643 = vpop.permute.xlu0 %642
    %v644 = vsel %vm95, %v631, %v633
    %v645 = vsel %vm95, %v633, %v635
    %v646 = vsel %vm95, %v635, %v637
    %v647 = vsel %vm95, %v637, %v639
    %v648 = vsel %vm95, %v639, %v641
    %v649 = vsel %vm95, %v641, %v643
    %656 = vrot.lane.b32.xlu0 %v600, 110
    %v657 = vpop.permute.xlu0 %656
    %658 = vrot.lane.b32.xlu0 %v588, 110
    %v659 = vpop.permute.xlu0 %658
    %660 = vrot.lane.b32.xlu0 %v589, 110
    %v661 = vpop.permute.xlu0 %660
    %662 = vrot.lane.b32.xlu0 %v590, 110
    %v663 = vpop.permute.xlu0 %662
    %664 = vrot.lane.b32.xlu0 %v591, 110
    %v665 = vpop.permute.xlu0 %664
    %666 = vrot.lane.b32.xlu0 %v592, 110
    %v667 = vpop.permute.xlu0 %666
    %668 = vrot.lane.b32.xlu0 %v601, 110
    %v669 = vpop.permute.xlu0 %668
    %v670 = vsel %vm122, %v657, %v659
    %v671 = vsel %vm122, %v659, %v661
    %v672 = vsel %vm122, %v661, %v663
    %v673 = vsel %vm122, %v663, %v665
    %v674 = vsel %vm122, %v665, %v667
    %v675 = vsel %vm122, %v667, %v669
    %682 = vrot.lane.b32.xlu0 %v600, 109
    %v683 = vpop.permute.xlu0 %682
    %684 = vrot.lane.b32.xlu0 %v588, 109
    %v685 = vpop.permute.xlu0 %684
    %686 = vrot.lane.b32.xlu0 %v589, 109
    %v687 = vpop.permute.xlu0 %686
    %688 = vrot.lane.b32.xlu0 %v590, 109
    %v689 = vpop.permute.xlu0 %688
    %690 = vrot.lane.b32.xlu0 %v591, 109
    %v691 = vpop.permute.xlu0 %690
    %692 = vrot.lane.b32.xlu0 %v592, 109
    %v693 = vpop.permute.xlu0 %692
    %694 = vrot.lane.b32.xlu0 %v601, 109
    %v695 = vpop.permute.xlu0 %694
    %v696 = vsel %vm149, %v683, %v685
    %v697 = vsel %vm149, %v685, %v687
    %v698 = vsel %vm149, %v687, %v689
    %v699 = vsel %vm149, %v689, %v691
    %v700 = vsel %vm149, %v691, %v693
    %v701 = vsel %vm149, %v693, %v695
    %708 = vrot.lane.b32.xlu0 %v600, 108
    %v709 = vpop.permute.xlu0 %708
    %710 = vrot.lane.b32.xlu0 %v588, 108
    %v711 = vpop.permute.xlu0 %710
    %712 = vrot.lane.b32.xlu0 %v589, 108
    %v713 = vpop.permute.xlu0 %712
    %714 = vrot.lane.b32.xlu0 %v590, 108
    %v715 = vpop.permute.xlu0 %714
    %716 = vrot.lane.b32.xlu0 %v591, 108
    %v717 = vpop.permute.xlu0 %716
    %718 = vrot.lane.b32.xlu0 %v592, 108
    %v719 = vpop.permute.xlu0 %718
    %720 = vrot.lane.b32.xlu0 %v601, 108
    %v721 = vpop.permute.xlu0 %720
    %v722 = vsel %vm176, %v709, %v711
    %v723 = vsel %vm176, %v711, %v713
    %v724 = vsel %vm176, %v713, %v715
    %v725 = vsel %vm176, %v715, %v717
    %v726 = vsel %vm176, %v717, %v719
    %v727 = vsel %vm176, %v719, %v721
    %734 = vrot.lane.b32.xlu0 %v600, 92
    %v735 = vpop.permute.xlu0 %734
    %736 = vrot.lane.b32.xlu0 %v588, 92
    %v737 = vpop.permute.xlu0 %736
    %738 = vrot.lane.b32.xlu0 %v589, 92
    %v739 = vpop.permute.xlu0 %738
    %740 = vrot.lane.b32.xlu0 %v590, 92
    %v741 = vpop.permute.xlu0 %740
    %742 = vrot.lane.b32.xlu0 %v591, 92
    %v743 = vpop.permute.xlu0 %742
    %744 = vrot.lane.b32.xlu0 %v592, 92
    %v745 = vpop.permute.xlu0 %744
    %746 = vrot.lane.b32.xlu0 %v601, 92
    %v747 = vpop.permute.xlu0 %746
    %v748 = vsel %vm203, %v735, %v737
    %v749 = vsel %vm203, %v737, %v739
    %v750 = vsel %vm203, %v739, %v741
    %v751 = vsel %vm203, %v741, %v743
    %v752 = vsel %vm203, %v743, %v745
    %v753 = vsel %vm203, %v745, %v747
    %760 = vrot.lane.b32.xlu0 %v600, 91
    %v761 = vpop.permute.xlu0 %760
    %762 = vrot.lane.b32.xlu0 %v588, 91
    %v763 = vpop.permute.xlu0 %762
    %764 = vrot.lane.b32.xlu0 %v589, 91
    %v765 = vpop.permute.xlu0 %764
    %766 = vrot.lane.b32.xlu0 %v590, 91
    %v767 = vpop.permute.xlu0 %766
    %768 = vrot.lane.b32.xlu0 %v591, 91
    %v769 = vpop.permute.xlu0 %768
    %770 = vrot.lane.b32.xlu0 %v592, 91
    %v771 = vpop.permute.xlu0 %770
    %772 = vrot.lane.b32.xlu0 %v601, 91
    %v773 = vpop.permute.xlu0 %772
    %v774 = vsel %vm230, %v761, %v763
    %v775 = vsel %vm230, %v763, %v765
    %v776 = vsel %vm230, %v765, %v767
    %v777 = vsel %vm230, %v767, %v769
    %v778 = vsel %vm230, %v769, %v771
    %v779 = vsel %vm230, %v771, %v773
    %786 = vrot.lane.b32.xlu0 %v600, 90
    %v787 = vpop.permute.xlu0 %786
    %788 = vrot.lane.b32.xlu0 %v588, 90
    %v789 = vpop.permute.xlu0 %788
    %790 = vrot.lane.b32.xlu0 %v589, 90
    %v791 = vpop.permute.xlu0 %790
    %792 = vrot.lane.b32.xlu0 %v590, 90
    %v793 = vpop.permute.xlu0 %792
    %794 = vrot.lane.b32.xlu0 %v591, 90
    %v795 = vpop.permute.xlu0 %794
    %796 = vrot.lane.b32.xlu0 %v592, 90
    %v797 = vpop.permute.xlu0 %796
    %798 = vrot.lane.b32.xlu0 %v601, 90
    %v799 = vpop.permute.xlu0 %798
    %v800 = vsel %vm257, %v787, %v789
    %v801 = vsel %vm257, %v789, %v791
    %v802 = vsel %vm257, %v791, %v793
    %v803 = vsel %vm257, %v793, %v795
    %v804 = vsel %vm257, %v795, %v797
    %v805 = vsel %vm257, %v797, %v799
    %v812 = vld [vmem:[%s3] sm:$0xff]
    %v813 = vld [vmem:[%s4] sm:$0xff]
    %815 = vset.pattern.permute.xlu0 0
    %816 = vperm.xlu0 %815, %v813
    %v817 = vpop.permute.xlu0 %816
    %vm819 = vcmask 588800
    %v821 = vsel %vm819, %v812, 0
    %823 = vmatprep.subr.mxu0 %v588
    %824 = vmatpush1.msra.mxu0 %v600
    %825 = vmatprep.subr.mxu0 %v619
    %826 = vmatpush1.msra.mxu0 %v618
    %827 = vmatprep.subr.mxu0 %v645
    %828 = vmatpush1.msra.mxu0 %v644
    %829 = vmatprep.subr.mxu0 %v671
    %830 = vmatpush1.msra.mxu0 %v670
    %831 = vmatprep.subr.mxu0 %v697
    %832 = vmatpush1.msra.mxu0 %v696
    %833 = vmatprep.subr.mxu0 %v723
    %834 = vmatpush1.msra.mxu0 %v722
    %835 = vmatprep.subr.mxu0 %v749
    %836 = vmatpush1.msra.mxu0 %v748
    %837 = vmatprep.subr.mxu0 %v775
    %838 = vmatpush1.msra.mxu0 %v774
    %839 = vmatprep.subr.mxu0 %v801
    %840 = vmatpush1.msra.mxu0 %v800
    %841 = vmatprep.subr.mxu0 0.0
    %842 = vmatpush1.msra.mxu0 0.0
    %843 = vmatprep.subr.mxu0 0.0
    %844 = vmatpush1.msra.mxu0 0.0
    %845 = vmatprep.subr.mxu0 0.0
    %846 = vmatpush1.msra.mxu0 0.0
    %847 = vmatprep.subr.mxu0 0.0
    %848 = vmatpush1.msra.mxu0 0.0
    %849 = vmatprep.subr.mxu0 0.0
    %850 = vmatpush1.msra.mxu0 0.0
    %851 = vmatprep.subr.mxu0 0.0
    %852 = vmatpush1.msra.mxu0 0.0
    %853 = vmatprep.subr.mxu0 0.0
    %854 = vmatpush1.msra.mxu0 0.0
    %855 = vmatprep.subr.mxu0 0.0
    %856 = vmatpush1.msra.mxu0 0.0
    %857 = vmatprep.subr.mxu0 0.0
    %858 = vmatpush1.msra.mxu0 0.0
    %859 = vmatprep.subr.mxu0 0.0
    %860 = vmatpush1.msra.mxu0 0.0
    %861 = vmatprep.subr.mxu0 0.0
    %862 = vmatpush1.msra.mxu0 0.0
    %863 = vmatprep.subr.mxu0 0.0
    %864 = vmatpush1.msra.mxu0 0.0
    %865 = vmatprep.subr.mxu0 0.0
    %866 = vmatpush1.msra.mxu0 0.0
    %867 = vmatprep.subr.mxu0 0.0
    %868 = vmatpush1.msra.mxu0 0.0
    %869 = vmatprep.subr.mxu0 0.0
    %870 = vmatpush1.msra.mxu0 0.0
    %871 = vmatprep.subr.mxu0 0.0
    %872 = vmatpush1.msra.mxu0 0.0
    %873 = vmatprep.subr.mxu0 0.0
    %874 = vmatpush1.msra.mxu0 0.0
    %875 = vmatprep.subr.mxu0 0.0
    %876 = vmatpush1.msra.mxu0 0.0
    %877 = vmatprep.subr.mxu0 0.0
    %878 = vmatpush1.msra.mxu0 0.0
    %879 = vmatprep.subr.mxu0 0.0
    %880 = vmatpush1.msra.mxu0 0.0
    %881 = vmatprep.subr.mxu0 0.0
    %882 = vmatpush1.msra.mxu0 0.0
    %883 = vmatprep.subr.mxu0 0.0
    %884 = vmatpush1.msra.mxu0 0.0
    %885 = vmatprep.subr.mxu0 0.0
    %886 = vmatpush1.msra.mxu0 0.0
    %887 = vmatprep.mubr.f32.mxu0 0.0
    %888 = vmatmul.mubr.f32.gmra.mrb[0].mxu0 %v821
    %v889 = vpop.f32.mrb[0].mxu0
    %v890 = vadd.f32 %v817, %v889
    %v891 = vpop.f32.mrb[0].mxu0
    %v892 = vadd.f32 %v817, %v891
    %893 = vdwg.mxu0
    %894 = vmatprep.subr.mxu0 %v590
    %895 = vmatpush1.msra.mxu0 %v589
    %896 = vmatprep.subr.mxu0 %v621
    %897 = vmatpush1.msra.mxu0 %v620
    %898 = vmatprep.subr.mxu0 %v647
    %899 = vmatpush1.msra.mxu0 %v646
    %900 = vmatprep.subr.mxu0 %v673
    %901 = vmatpush1.msra.mxu0 %v672
    %902 = vmatprep.subr.mxu0 %v699
    %903 = vmatpush1.msra.mxu0 %v698
    %904 = vmatprep.subr.mxu0 %v725
    %905 = vmatpush1.msra.mxu0 %v724
    %906 = vmatprep.subr.mxu0 %v751
    %907 = vmatpush1.msra.mxu0 %v750
    %908 = vmatprep.subr.mxu0 %v777
    %909 = vmatpush1.msra.mxu0 %v776
    %910 = vmatprep.subr.mxu0 %v803
    %911 = vmatpush1.msra.mxu0 %v802
    %912 = vmatprep.subr.mxu0 0.0
    %913 = vmatpush1.msra.mxu0 0.0
    %914 = vmatprep.subr.mxu0 0.0
    %915 = vmatpush1.msra.mxu0 0.0
    %916 = vmatprep.subr.mxu0 0.0
    %917 = vmatpush1.msra.mxu0 0.0
    %918 = vmatprep.subr.mxu0 0.0
    %919 = vmatpush1.msra.mxu0 0.0
    %920 = vmatprep.subr.mxu0 0.0
    %921 = vmatpush1.msra.mxu0 0.0
    %922 = vmatprep.subr.mxu0 0.0
    %923 = vmatpush1.msra.mxu0 0.0
    %924 = vmatprep.subr.mxu0 0.0
    %925 = vmatpush1.msra.mxu0 0.0
    %926 = vmatprep.subr.mxu0 0.0
    %927 = vmatpush1.msra.mxu0 0.0
    %928 = vmatprep.subr.mxu0 0.0
    %929 = vmatpush1.msra.mxu0 0.0
    %930 = vmatprep.subr.mxu0 0.0
    %931 = vmatpush1.msra.mxu0 0.0
    %932 = vmatprep.subr.mxu0 0.0
    %933 = vmatpush1.msra.mxu0 0.0
    %934 = vmatprep.subr.mxu0 0.0
    %935 = vmatpush1.msra.mxu0 0.0
    %936 = vmatprep.subr.mxu0 0.0
    %937 = vmatpush1.msra.mxu0 0.0
    %938 = vmatprep.subr.mxu0 0.0
    %939 = vmatpush1.msra.mxu0 0.0
    %940 = vmatprep.subr.mxu0 0.0
    %941 = vmatpush1.msra.mxu0 0.0
    %942 = vmatprep.subr.mxu0 0.0
    %943 = vmatpush1.msra.mxu0 0.0
    %944 = vmatprep.subr.mxu0 0.0
    %945 = vmatpush1.msra.mxu0 0.0
    %946 = vmatprep.subr.mxu0 0.0
    %947 = vmatpush1.msra.mxu0 0.0
    %948 = vmatprep.subr.mxu0 0.0
    %949 = vmatpush1.msra.mxu0 0.0
    %950 = vmatprep.subr.mxu0 0.0
    %951 = vmatpush1.msra.mxu0 0.0
    %952 = vmatprep.subr.mxu0 0.0
    %953 = vmatpush1.msra.mxu0 0.0
    %954 = vmatprep.subr.mxu0 0.0
    %955 = vmatpush1.msra.mxu0 0.0
    %956 = vmatprep.subr.mxu0 0.0
    %957 = vmatpush1.msra.mxu0 0.0
    %958 = vmatprep.mubr.f32.mxu0 0.0
    %959 = vmatmul.mubr.f32.gmra.mrb[0].mxu0 %v821
    %v960 = vpop.f32.mrb[0].mxu0
    %v961 = vadd.f32 %v817, %v960
    %v962 = vpop.f32.mrb[0].mxu0
    %v963 = vadd.f32 %v817, %v962
    %964 = vdwg.mxu0
    %965 = vmatprep.subr.mxu0 %v592
    %966 = vmatpush1.msra.mxu0 %v591
    %967 = vmatprep.subr.mxu0 %v623
    %968 = vmatpush1.msra.mxu0 %v622
    %969 = vmatprep.subr.mxu0 %v649
    %970 = vmatpush1.msra.mxu0 %v648
    %971 = vmatprep.subr.mxu0 %v675
    %972 = vmatpush1.msra.mxu0 %v674
    %973 = vmatprep.subr.mxu0 %v701
    %974 = vmatpush1.msra.mxu0 %v700
    %975 = vmatprep.subr.mxu0 %v727
    %976 = vmatpush1.msra.mxu0 %v726
    %977 = vmatprep.subr.mxu0 %v753
    %978 = vmatpush1.msra.mxu0 %v752
    %979 = vmatprep.subr.mxu0 %v779
    %980 = vmatpush1.msra.mxu0 %v778
    %981 = vmatprep.subr.mxu0 %v805
    %982 = vmatpush1.msra.mxu0 %v804
    %983 = vmatprep.subr.mxu0 0.0
    %984 = vmatpush1.msra.mxu0 0.0
    %985 = vmatprep.subr.mxu0 0.0
    %986 = vmatpush1.msra.mxu0 0.0
    %987 = vmatprep.subr.mxu0 0.0
    %988 = vmatpush1.msra.mxu0 0.0
    %989 = vmatprep.subr.mxu0 0.0
    %990 = vmatpush1.msra.mxu0 0.0
    %991 = vmatprep.subr.mxu0 0.0
    %992 = vmatpush1.msra.mxu0 0.0
    %993 = vmatprep.subr.mxu0 0.0
    %994 = vmatpush1.msra.mxu0 0.0
    %995 = vmatprep.subr.mxu0 0.0
    %996 = vmatpush1.msra.mxu0 0.0
    %997 = vmatprep.subr.mxu0 0.0
    %998 = vmatpush1.msra.mxu0 0.0
    %999 = vmatprep.subr.mxu0 0.0
    %1000 = vmatpush1.msra.mxu0 0.0
    %1001 = vmatprep.subr.mxu0 0.0
    %1002 = vmatpush1.msra.mxu0 0.0
    %1003 = vmatprep.subr.mxu0 0.0
    %1004 = vmatpush1.msra.mxu0 0.0
    %1005 = vmatprep.subr.mxu0 0.0
    %1006 = vmatpush1.msra.mxu0 0.0
    %1007 = vmatprep.subr.mxu0 0.0
    %1008 = vmatpush1.msra.mxu0 0.0
    %1009 = vmatprep.subr.mxu0 0.0
    %1010 = vmatpush1.msra.mxu0 0.0
    %1011 = vmatprep.subr.mxu0 0.0
    %1012 = vmatpush1.msra.mxu0 0.0
    %1013 = vmatprep.subr.mxu0 0.0
    %1014 = vmatpush1.msra.mxu0 0.0
    %1015 = vmatprep.subr.mxu0 0.0
    %1016 = vmatpush1.msra.mxu0 0.0
    %1017 = vmatprep.subr.mxu0 0.0
    %1018 = vmatpush1.msra.mxu0 0.0
    %1019 = vmatprep.subr.mxu0 0.0
    %1020 = vmatpush1.msra.mxu0 0.0
    %1021 = vmatprep.subr.mxu0 0.0
    %1022 = vmatpush1.msra.mxu0 0.0
    %1023 = vmatprep.subr.mxu0 0.0
    %1024 = vmatpush1.msra.mxu0 0.0
    %1025 = vmatprep.subr.mxu0 0.0
    %1026 = vmatpush1.msra.mxu0 0.0
    %1027 = vmatprep.subr.mxu0 0.0
    %1028 = vmatpush1.msra.mxu0 0.0
    %1029 = vmatprep.mubr.f32.mxu0 0.0
    %1030 = vmatmul.mubr.f32.gmra.mrb[0].mxu0 %v821
    %v1031 = vpop.f32.mrb[0].mxu0
    %v1032 = vadd.f32 %v817, %v1031
    %v1033 = vpop.f32.mrb[0].mxu0
    %v1034 = vadd.f32 %v817, %v1033
    %1035 = vdwg.mxu0
    %v1036 = vmax.f32 %v890, 0.0
    %v1037 = vmax.f32 %v892, 0.0
    %v1038 = vmax.f32 %v961, 0.0
    %v1039 = vmax.f32 %v963, 0.0
    %v1040 = vmax.f32 %v1032, 0.0
    %v1041 = vmax.f32 %v1034, 0.0
    %1042 = vst [vmem:[#allocation5] sm:$0xff] %v1036
    %1043 = vst [vmem:[#allocation5 + $0x8] sm:$0xff] %v1037
    %1044 = vst [vmem:[#allocation5 + $0x10] sm:$0xff] %v1038
    %1045 = vst [vmem:[#allocation5 + $0x18] sm:$0xff] %v1039
    %1046 = vst [vmem:[#allocation5 + $0x20] sm:$0xff] %v1040
    %1047 = vst [vmem:[#allocation5 + $0x28] sm:$0xff] %v1041
    // Predicated region
    $region30: #{tpu_custom_call.1} parent=1 // pred_check
      _
    $region31: #{tpu_custom_call.1} parent=1 // pred_check_branch
      %1049 = sbr.rel (0) target = $region33
    $region32: #{tpu_custom_call.1} parent=1 // pred_region
      %s1051 = ssub.s32 768, 768
      %1052 = vsyncadd [#allocation4], %s1051
      %s1054 = sshll.u32 [#allocation5], 4
      %s1055 = int_to_ptr.vmem [resolvable:$true] %s1054
      %1057 = dma.vmem_to_hbm [thread:$0]  %s1055, 768, %s6, [#allocation4]
    $region33: #{tpu_custom_call.1} parent=1 // pred_fallthru
      _
    // Predicated region
    $region34: #{tpu_custom_call.1} parent=1 // pred_check
      _
    $region35: #{tpu_custom_call.1} parent=1 // pred_check_branch
      %1059 = sbr.rel (0) target = $region37
    $region36: #{tpu_custom_call.1} parent=1 // pred_region
      %1060 = dma.done [#allocation4], 768
    $region37: #{tpu_custom_call.1} parent=1 // pred_fallthru
      _
    %1061 = vsyncpa [#allocation3], 1
    %1062 = vsyncpa [#allocation4], 1

</llo_original>
